<compile_context>
chip_gen: v5e
topology: v5e:2x2
jax: 0.10.0
libtpu: 0.0.40
codegen_flags: <defaults>
</compile_context>

<pallas_src>
import functools

import jax
import jax.numpy as jnp
from jax import lax
from jax.experimental import pallas as pl
from jax.experimental.pallas import tpu as pltpu


def _round_up(x, m):
    return (x + m - 1) // m * m


def _grad_abs_sum_kernel(sr_ref, hr_ref, out_ref, *, h, w, W, M3, TM, need_mask):
    # sr_ref / hr_ref : (TM, L) tiles in the inputs' native dtype.
    #   One row = one (b, c, a1) strip of sub-apertures, flattened row-major:
    #   flat index p = y * W + x with W = angRes * w, y in [0, h), x in [0, W).
    # out_ref         : (1, 8, 128) f32 — this block's partial abs-sum
    #                   (broadcast scalar), reduced once in the wrapper.
    L = sr_ref.shape[-1]
    f32 = jnp.float32

    # Native-dtype DMA; upcast on the VPU (halves HBM traffic for bf16 inputs).
    d = sr_ref[...].astype(f32) - hr_ref[...].astype(f32)            # (TM, L)

    # Lane-position bookkeeping (O(L), computed once per block).
    p = lax.broadcasted_iota(jnp.int32, (1, L), 1)                    # flat idx
    xw = p % w                                # column inside a sub-aperture
    mv = p >= 2 * W                           # vertical-interior rows (y >= 2)
    mh = xw >= 2                              # horizontal-interior columns
    # Padding=2 conv boundary rows/cols each contribute |D| once; fold both
    # contributions into a single 0/1/2 weight.
    y_b = (p < 2 * W) | (p >= (h - 2) * W)
    x_b = (xw < 2) | (xw >= w - 2)
    wgt = y_b.astype(f32) + x_b.astype(f32)

    # Offset-2 diffs via XLU rolls; wrap positions are excluded by mv / mh.
    dv = d - pltpu.roll(d, 2 * W, axis=1)     # D[y, x] - D[y-2, x]
    dh = d - pltpu.roll(d, 2, axis=1)         # D[y, x] - D[y, x-2]

    total = (jnp.where(mv, jnp.abs(dv), 0.0)
             + jnp.where(mh, jnp.abs(dh), 0.0)
             + jnp.abs(d) * wgt)

    # Hierarchical reduce: lanes first (per strip), then across strips.
    per_strip = jnp.sum(total, axis=1, keepdims=True)                 # (TM, 1)
    if need_mask:
        # Only the last block holds invalid strips; mask whole per-strip sums
        # (O(TM)) instead of masking every element.  jnp.where selects, so any
        # garbage (even NaN) in out-of-bounds strips is dropped safely.
        row = lax.broadcasted_iota(jnp.int32, (TM, 1), 0)
        per_strip = jnp.where(row < (M3 - pl.program_id(0) * TM), per_strip, 0.0)

    out_ref[...] = jnp.broadcast_to(jnp.sum(per_strip), out_ref.shape)


def grad_loss_pallas(SRt, HRt, angRes, max_block_bytes=4 * 1024 * 1024):
    """Gradient-stencil L1 loss of (SRt - HRt), both [B, 3, angRes*h, angRes*w]."""
    B, C, H, W_full = SRt.shape
    assert C == 3, "grad_loss loops over exactly 3 colour channels"
    assert H % angRes == 0 and W_full % angRes == 0
    h, w = H // angRes, W_full // angRes
    assert h >= 4 and w >= 4, "sub-aperture patches must be at least 4x4"
    W = W_full                      # strip width = angRes * w
    L = h * W                       # lane-dense flattened strip length
    M3 = B * C * angRes             # one strip per (b, c, a1)

    # Copy-free reshape: [B,3,angRes*h,angRes*w] -> [M3, h*W]; native dtype.
    SR2 = SRt.reshape(M3, L)
    HR2 = HRt.reshape(M3, L)

    # --- TM sizing from the (8,128)-padded VMEM footprint -------------------
    itemsize = jnp.dtype(SRt.dtype).itemsize
    sub = {4: 8, 2: 16, 1: 32}.get(itemsize, 8)     # native sublane granularity
    Lpad = _round_up(L, 128)                        # lane-padded strip bytes
    rows_budget = max(1, max_block_bytes // (Lpad * itemsize))

    if rows_budget >= M3:
        TM = M3                                     # single block (full extent)
    else:
        TM_max = max(sub, (rows_budget // sub) * sub)
        TM = None
        for t in range(TM_max, 0, -sub):            # prefer an exact divisor
            if M3 % t == 0:                         # -> no remainder masking
                TM = t
                break
        if TM is None or 2 * TM < TM_max:
            TM = TM_max
    if TM >= M3:
        TM = M3
    G = -(-M3 // TM)
    need_mask = (M3 % TM) != 0

    kernel = functools.partial(_grad_abs_sum_kernel, h=h, w=w, W=W,
                               M3=M3, TM=TM, need_mask=need_mask)

    partials = pl.pallas_call(
        kernel,
        out_shape=jax.ShapeDtypeStruct((G, 8, 128), jnp.float32),
        grid=(G,),
        in_specs=[pl.BlockSpec((TM, L), lambda i: (i, 0)),
                  pl.BlockSpec((TM, L), lambda i: (i, 0))],
        out_specs=pl.BlockSpec((1, 8, 128), lambda i: (i, 0, 0)),
        compiler_params=pltpu.CompilerParams(
            # Independent per-block partials -> parallel (megacore / 2-TC OK).
            dimension_semantics=("parallel",),
            # 2 inputs x 2 buffers x <=4 MiB padded blocks ~ 16 MiB; 32 MiB
            # scoped limit leaves headroom and is safe on v7x's 64 MiB VMEM.
            vmem_limit_bytes=32 * 1024 * 1024),
    )(SR2, HR2)

    total = jnp.sum(partials[:, 0, 0])
    # Each of the 6 L1 losses (3 channels x {v, h}) is a mean over
    # (B*angRes^2) * (h+2) * (w+2) elements; all share the same count.
    count = jnp.float32(B * angRes * angRes * (h + 2) * (w + 2))
    return total / count


def grad_loss_reference(SRt, HRt, angRes):
    # Pure-JAX reference mirroring the PyTorch conv2d(padding=2) semantics.
    B, C, H, W = SRt.shape
    h, w = H // angRes, W // angRes
    D = SRt.astype(jnp.float32) - HRt.astype(jnp.float32)
    D = D.reshape(B, C, angRes, h, angRes, w).transpose(0, 1, 2, 4, 3, 5)
    D = D.reshape(-1, h, w)
    Dp = jnp.pad(D, ((0, 0), (2, 2), (2, 2)))
    gv = Dp[:, 2:, 1:-1] - Dp[:, :-2, 1:-1]
    gh = Dp[:, 1:-1, 2:] - Dp[:, 1:-1, :-2]
    count = B * angRes * angRes * (h + 2) * (w + 2)
    return (jnp.sum(jnp.abs(gv)) + jnp.sum(jnp.abs(gh))) / count


if __name__ == "__main__":
    key = jax.random.PRNGKey(0)
    k1, k2 = jax.random.split(key)

    B, C, angRes, h, w = 2, 3, 2, 8, 8            # SRt/HRt: [2, 3, 16, 16]
    H, W = angRes * h, angRes * w
    SRt = jax.random.normal(k1, (B, C, H, W), dtype=jnp.float32)
    HRt = jax.random.normal(k2, (B, C, H, W), dtype=jnp.float32)

    ref = jax.block_until_ready(grad_loss_reference(SRt, HRt, angRes))

    # Single-block path (all strips fit in one block).
    loss = jax.block_until_ready(grad_loss_pallas(SRt, HRt, angRes))
    assert jnp.allclose(loss, ref, rtol=1e-5, atol=1e-5), (loss, ref)

    # Multi-block path with a remainder block (exercises grid + strip masking).
    loss2 = jax.block_until_ready(
        grad_loss_pallas(SRt, HRt, angRes, max_block_bytes=8 * h * W * 4))
    assert jnp.allclose(loss2, ref, rtol=1e-5, atol=1e-5), (loss2, ref)

    # bf16 inputs: native-dtype DMA, in-kernel f32 upcast/accumulation.
    SRb, HRb = SRt.astype(jnp.bfloat16), HRt.astype(jnp.bfloat16)
    ref_b = jax.block_until_ready(grad_loss_reference(SRb, HRb, angRes))
    loss_b = jax.block_until_ready(grad_loss_pallas(SRb, HRb, angRes))
    assert jnp.allclose(loss_b, ref_b, rtol=1e-4, atol=1e-4), (loss_b, ref_b)

    print("KERNEL_OK")
</pallas_src>

<mosaic_0001>
module attributes {stable_mosaic.version = 11 : i64} {
  func.func @_grad_abs_sum_kernel(%arg0: i32, %arg1: memref<12x128xf32, #tpu.memory_space<vmem>>, %arg2: memref<12x128xf32, #tpu.memory_space<vmem>>, %arg3: memref<1x8x128xf32, #tpu.memory_space<vmem>>) attributes {dimension_semantics = [#tpu.dimension_semantics<parallel>], iteration_bounds = array<i64: 1>, scalar_prefetch = 0 : i64, scratch_operands = 0 : i64, tpu.core_type = #tpu.core_type<tc>, window_params = [{transform_indices = @transform_0, window_bounds = array<i64: 12, 128>}, {transform_indices = @transform_1, window_bounds = array<i64: 12, 128>}, {transform_indices = @transform_2, window_bounds = array<i64: 1, 8, 128>}]} {
    %c0 = arith.constant 0 : index
    %c0_0 = arith.constant 0 : index
    %0 = vector.load %arg1[%c0, %c0_0] : memref<12x128xf32, #tpu.memory_space<vmem>>, vector<12x128xf32>
    %c0_1 = arith.constant 0 : index
    %c0_2 = arith.constant 0 : index
    %1 = vector.load %arg2[%c0_1, %c0_2] : memref<12x128xf32, #tpu.memory_space<vmem>>, vector<12x128xf32>
    %2 = arith.subf %0, %1 : vector<12x128xf32>
    %3 = tpu.iota {dimensions = array<i32: 1>} : vector<1x128xi32>
    %c8_i32 = arith.constant 8 : i32
    %c0_i32 = arith.constant 0 : i32
    %4 = arith.cmpi eq, %c8_i32, %c0_i32 : i32
    %c1_i32 = arith.constant 1 : i32
    %5 = arith.select %4, %c1_i32, %c8_i32 : i32
    %6 = vector.broadcast %5 : i32 to vector<1x128xi32>
    %7 = arith.remsi %3, %6 : vector<1x128xi32>
    %c0_i32_3 = arith.constant 0 : i32
    %8 = vector.broadcast %c0_i32_3 : i32 to vector<1x128xi32>
    %9 = arith.cmpi ne, %7, %8 : vector<1x128xi32>
    %c0_i32_4 = arith.constant 0 : i32
    %10 = vector.broadcast %c0_i32_4 : i32 to vector<1x128xi32>
    %11 = arith.cmpi slt, %7, %10 : vector<1x128xi32>
    %c0_i32_5 = arith.constant 0 : i32
    %12 = arith.cmpi slt, %5, %c0_i32_5 : i32
    %13 = vector.broadcast %12 : i1 to vector<1x128xi1>
    %14 = vector.broadcast %13 : vector<1x128xi1> to vector<1x128xi1>
    %15 = arith.xori %11, %14 : vector<1x128xi1>
    %16 = arith.andi %15, %9 : vector<1x128xi1>
    %17 = vector.broadcast %5 : i32 to vector<1x128xi32>
    %18 = arith.addi %7, %17 : vector<1x128xi32>
    %19 = arith.select %16, %18, %7 : vector<1x128xi1>, vector<1x128xi32>
    %c32_i32 = arith.constant 32 : i32
    %20 = vector.broadcast %c32_i32 : i32 to vector<1x128xi32>
    %21 = arith.cmpi sge, %3, %20 : vector<1x128xi32>
    %c2_i32 = arith.constant 2 : i32
    %22 = vector.broadcast %c2_i32 : i32 to vector<1x128xi32>
    %23 = arith.cmpi sge, %19, %22 : vector<1x128xi32>
    %c32_i32_6 = arith.constant 32 : i32
    %24 = vector.broadcast %c32_i32_6 : i32 to vector<1x128xi32>
    %25 = arith.cmpi slt, %3, %24 : vector<1x128xi32>
    %c96_i32 = arith.constant 96 : i32
    %26 = vector.broadcast %c96_i32 : i32 to vector<1x128xi32>
    %27 = arith.cmpi sge, %3, %26 : vector<1x128xi32>
    %28 = arith.ori %25, %27 : vector<1x128xi1>
    %c2_i32_7 = arith.constant 2 : i32
    %29 = vector.broadcast %c2_i32_7 : i32 to vector<1x128xi32>
    %30 = arith.cmpi slt, %19, %29 : vector<1x128xi32>
    %c6_i32 = arith.constant 6 : i32
    %31 = vector.broadcast %c6_i32 : i32 to vector<1x128xi32>
    %32 = arith.cmpi sge, %19, %31 : vector<1x128xi32>
    %33 = arith.ori %30, %32 : vector<1x128xi1>
    %34 = arith.extui %28 : vector<1x128xi1> to vector<1x128xi32>
    %35 = arith.sitofp %34 : vector<1x128xi32> to vector<1x128xf32>
    %36 = arith.extui %33 : vector<1x128xi1> to vector<1x128xi32>
    %37 = arith.sitofp %36 : vector<1x128xi32> to vector<1x128xf32>
    %38 = arith.addf %35, %37 : vector<1x128xf32>
    %c32_i32_8 = arith.constant 32 : i32
    %39 = tpu.dynamic_rotate %2 by %c32_i32_8 dim 1 : vector<12x128xf32>, i32 -> vector<12x128xf32>
    %40 = arith.subf %2, %39 : vector<12x128xf32>
    %c2_i32_9 = arith.constant 2 : i32
    %41 = tpu.dynamic_rotate %2 by %c2_i32_9 dim 1 : vector<12x128xf32>, i32 -> vector<12x128xf32>
    %42 = arith.subf %2, %41 : vector<12x128xf32>
    %43 = math.absf %40 : vector<12x128xf32>
    %cst = arith.constant 0.000000e+00 : f32
    %44 = vector.shape_cast %21 : vector<1x128xi1> to vector<1x128xi1>
    %45 = vector.broadcast %44 : vector<1x128xi1> to vector<12x128xi1>
    %46 = vector.broadcast %cst : f32 to vector<12x128xf32>
    %47 = arith.select %45, %43, %46 : vector<12x128xi1>, vector<12x128xf32>
    %48 = math.absf %42 : vector<12x128xf32>
    %cst_10 = arith.constant 0.000000e+00 : f32
    %49 = vector.shape_cast %23 : vector<1x128xi1> to vector<1x128xi1>
    %50 = vector.broadcast %49 : vector<1x128xi1> to vector<12x128xi1>
    %51 = vector.broadcast %cst_10 : f32 to vector<12x128xf32>
    %52 = arith.select %50, %48, %51 : vector<12x128xi1>, vector<12x128xf32>
    %53 = arith.addf %47, %52 : vector<12x128xf32>
    %54 = math.absf %2 : vector<12x128xf32>
    %55 = vector.broadcast %38 : vector<1x128xf32> to vector<12x128xf32>
    %56 = arith.mulf %54, %55 : vector<12x128xf32>
    %57 = arith.addf %53, %56 : vector<12x128xf32>
    %cst_11 = arith.constant dense<0.000000e+00> : vector<12xf32>
    %58 = vector.multi_reduction <add>, %57, %cst_11 [1] : vector<12x128xf32> to vector<12xf32>
    %59 = vector.shape_cast %58 : vector<12xf32> to vector<12x1xf32>
    %60 = vector.shape_cast %59 : vector<12x1xf32> to vector<1x12x1xf32>
    %cst_12 = arith.constant dense<0.000000e+00> : vector<1xf32>
    %61 = vector.multi_reduction <add>, %60, %cst_12 [1, 2] : vector<1x12x1xf32> to vector<1xf32>
    %62 = vector.shape_cast %61 : vector<1xf32> to vector<1x1x1xf32>
    %63 = vector.extract %62[0, 0, 0] : f32 from vector<1x1x1xf32>
    %64 = vector.broadcast %63 : f32 to vector<1x8x128xf32>
    %c0_13 = arith.constant 0 : index
    %c0_14 = arith.constant 0 : index
    %c0_15 = arith.constant 0 : index
    %65 = vector.load %arg3[%c0_13, %c0_14, %c0_15] : memref<1x8x128xf32, #tpu.memory_space<vmem>>, vector<1x8x128xf32>
    tpu.vector_store %arg3[%c0_13, %c0_14, %c0_15], %64 {strides = array<i32>} : memref<1x8x128xf32, #tpu.memory_space<vmem>>, vector<1x8x128xf32>,
    return
  }
  func.func @transform_0(%arg0: i32) -> (i32, i32) {
    %c0_i32 = arith.constant 0 : i32
    %c0_i32_0 = arith.constant 0 : i32
    return %arg0, %c0_i32 : i32, i32
  }
  func.func @transform_1(%arg0: i32) -> (i32, i32) {
    %c0_i32 = arith.constant 0 : i32
    %c0_i32_0 = arith.constant 0 : i32
    return %arg0, %c0_i32 : i32, i32
  }
  func.func @transform_2(%arg0: i32) -> (i32, i32, i32) {
    %c0_i32 = arith.constant 0 : i32
    %c0_i32_0 = arith.constant 0 : i32
    %c0_i32_1 = arith.constant 0 : i32
    return %arg0, %c0_i32, %c0_i32_0 : i32, i32, i32
  }
}

</mosaic_0001>

<llo_original>
// kernel: tpu_custom_call.1
$region0: #{tpu_custom_call.1}
  #allocation0 [shape = 'u32[]', space=smem, size = 0x4, offset = 0x4, fixed_abs, tag = 'smem constant byte address 0x4 - core index']
  #allocation1 [shape = 'u32[72,128]{1,0:T(1,128)}', space=vmem, size = 0x9000, scoped, tag = 'internal scratch']
  %s0 = inlined_call_operand.hbm [shape: f32[12,128], index: 0, kind: input, shape index: {}]
  %s1 = inlined_call_operand.hbm [shape: f32[12,128], index: 1, kind: input, shape index: {}]
  %s2 = inlined_call_operand.hbm [shape: f32[1,8,128], index: 2, kind: output, shape index: {}]
  %s3 = sld [smem:[#allocation0]]
  $region26: #{tpu_custom_call.1} parent=0
    _
  %s5 = ssub.s32 1, %s3
  %s6 = scalar_select 0, %s5, %s3
  $region1: #{tpu_custom_call.1} parent=0
    #allocation2 [shape = 'u8[8192]{0}', space=vmem, size = 0x2000, scoped, tag = 'input window, operand 0, single buffered']
    #allocation3 [shape = 's32[1]{0}', space=sflag, size = 0x4, scoped, tag = 'scoped memory for tpu_custom_call.1']
    #allocation4 [shape = 's32[1]{0}', space=sflag, size = 0x4, scoped, tag = 'scoped memory for tpu_custom_call.1']
    #allocation5 [shape = 'u8[8192]{0}', space=vmem, size = 0x2000, scoped, tag = 'input window, operand 1, single buffered']
    #allocation6 [shape = 's32[1]{0}', space=sflag, size = 0x4, scoped, tag = 'scoped memory for tpu_custom_call.1']
    #allocation7 [shape = 'u8[4096]{0}', space=vmem, size = 0x1000, scoped, tag = 'output window, operand 0, single buffered']
    %7 = vsyncpa [#allocation3], 0
    %8 = vsyncpa [#allocation6], 0
    %9 = vsyncpa [#allocation4], 0
    // Predicated region
    $region2: #{tpu_custom_call.1} parent=1 // pred_check
      _
    $region3: #{tpu_custom_call.1} parent=1 // pred_check_branch
      %11 = sbr.rel (0) target = $region5
    $region4: #{tpu_custom_call.1} parent=1 // pred_region
      %13 = vsyncadd [#allocation3], 0
      %s14 = sshll.u32 %s0, 4
      %s15 = int_to_ptr.hbm [resolvable:$true] %s14
      %s16 = sshll.u32 [#allocation2], 4
      %s17 = int_to_ptr.vmem [resolvable:$true] %s16
      %22 = dma.hbm_to_vmem [thread:$0]  %s15, 256, %s17, [#allocation3], 128, 128, 8
    $region5: #{tpu_custom_call.1} parent=1 // pred_fallthru
      _
    // Predicated region
    $region6: #{tpu_custom_call.1} parent=1 // pred_check
      _
    $region7: #{tpu_custom_call.1} parent=1 // pred_check_branch
      %24 = sbr.rel (0) target = $region9
    $region8: #{tpu_custom_call.1} parent=1 // pred_region
      %26 = vsyncadd [#allocation6], 0
      %s27 = sshll.u32 %s1, 4
      %s28 = int_to_ptr.hbm [resolvable:$true] %s27
      %s29 = sshll.u32 [#allocation5], 4
      %s30 = int_to_ptr.vmem [resolvable:$true] %s29
      %35 = dma.hbm_to_vmem [thread:$0]  %s28, 256, %s30, [#allocation6], 128, 128, 8
    $region9: #{tpu_custom_call.1} parent=1 // pred_fallthru
      _
    // Predicated region
    $region10: #{tpu_custom_call.1} parent=1 // pred_check
      _
    $region11: #{tpu_custom_call.1} parent=1 // pred_check_branch
      %37 = sbr.rel (0) target = $region13
    $region12: #{tpu_custom_call.1} parent=1 // pred_region
      %39 = dma.done [#allocation3], 256
    $region13: #{tpu_custom_call.1} parent=1 // pred_fallthru
      _
    // Predicated region
    $region14: #{tpu_custom_call.1} parent=1 // pred_check
      _
    $region15: #{tpu_custom_call.1} parent=1 // pred_check_branch
      %41 = sbr.rel (0) target = $region17
    $region16: #{tpu_custom_call.1} parent=1 // pred_region
      %43 = dma.done [#allocation6], 256
    $region17: #{tpu_custom_call.1} parent=1 // pred_fallthru
      _
    %v44 = vld [vmem:[#allocation2] sm:$0xff]
    %v45 = vld [vmem:[#allocation2 + $0x8] sm:$0xf]
    %v46 = vld [vmem:[#allocation5] sm:$0xff]
    %v47 = vld [vmem:[#allocation5 + $0x8] sm:$0xf]
    %v48 = vsub.f32 %v44, %v46
    %v49 = vsub.f32 %v45, %v47
    %v50 = vlaneseq
    %v51 = vand.u32 %v50, 127
    %vm52 = vcmp.lt.s32.totalorder %v51, 0
    %v53 = vsub.s32 0, %v51
    %v54 = vsel %vm52, %v53, %v51
    %v55 = vshrl.u32 %v54, 3
    %v56 = vand.u32 %v54, 7
    %v57 = vsub.s32 0, %v56
    %v58 = vsel %vm52, %v57, %v56
    %vm59 = vcmp.ne.s32.totalorder %v58, 0
    %vm60 = vcmp.lt.s32.totalorder %v58, 0
    %vm61 = vmand %vm60, %vm59
    %v62 = vadd.s32 %v58, 8
    %v63 = vsel %vm61, %v62, %v58
    %vm64 = vcmp.ge.s32.totalorder %v51, 32
    %vm65 = vcmp.ge.s32.totalorder %v63, 2
    %vm66 = vcmp.lt.s32.totalorder %v51, 32
    %vm67 = vcmp.ge.s32.totalorder %v51, 96
    %vm68 = vmor %vm66, %vm67
    %vm69 = vcmp.lt.s32.totalorder %v63, 2
    %vm70 = vcmp.ge.s32.totalorder %v63, 6
    %vm71 = vmor %vm69, %vm70
    %v72 = vsel %vm68, 1, 0
    %v73 = vcvt.s32.f32 %v72
    %v74 = vsel %vm71, 1, 0
    %v75 = vcvt.s32.f32 %v74
    %v76 = vadd.f32 %v73, %v75
    %77 = vrot.lane.b32.xlu0 %v48, 32
    %v78 = vpop.permute.xlu0 %77
    %79 = vrot.lane.b32.xlu0 %v49, 32
    %v80 = vpop.permute.xlu0 %79
    %v81 = vsub.f32 %v48, %v78
    %v82 = vsub.f32 %v49, %v80
    %83 = vrot.lane.b32.xlu0 %v48, 2
    %v84 = vpop.permute.xlu0 %83
    %85 = vrot.lane.b32.xlu0 %v49, 2
    %v86 = vpop.permute.xlu0 %85
    %v87 = vsub.f32 %v48, %v84
    %v88 = vsub.f32 %v49, %v86
    %v89 = vand.u32 2147483647, %v81
    %v90 = vand.u32 2147483647, %v82
    %v91 = vsel %vm64, 1, 0
    %vm92 = vcmp.eq.s32.totalorder %v91, 1
    %v93 = vsel %vm92, %v89, 0.0
    %v94 = vsel %vm92, %v90, 0.0
    %v95 = vand.u32 2147483647, %v87
    %v96 = vand.u32 2147483647, %v88
    %v97 = vsel %vm65, 1, 0
    %vm98 = vcmp.eq.s32.totalorder %v97, 1
    %v99 = vsel %vm98, %v95, 0.0
    %v100 = vsel %vm98, %v96, 0.0
    %v101 = vadd.f32 %v93, %v99
    %v102 = vadd.f32 %v94, %v100
    %v103 = vand.u32 2147483647, %v48
    %v104 = vand.u32 2147483647, %v49
    %v105 = vmul.f32 %v103, %v76
    %v106 = vmul.f32 %v104, %v76
    %v107 = vadd.f32 %v101, %v105
    %v108 = vadd.f32 %v102, %v106
    %109 = vadd.xlane.f32.xlu0 %v107
    %v110 = vpop.xlane.xlu0 %109
    %vm111 = vcmask 1043456
    %v112 = vsel %vm111, %v108, 0.0
    %113 = vadd.xlane.f32.xlu0 %v112
    %v114 = vpop.xlane.xlu0 %113
    %vm115 = vcmask 7168
    %v116 = vsel %vm115, %v110, 0.0
    %vm117 = vcmask 3072
    %v118 = vsel %vm117, %v114, 0.0
    %v119 = vadd.f32 %v116, %v118
    %120 = vadd.xlane.f32.xlu0 %v119
    %v121 = vpop.xlane.xlu0 %120
    %v122 = vrot.slane %v121, 4
    %v123 = vadd.f32 %v121, %v122
    %v124 = vrot.slane %v123, 2
    %v125 = vadd.f32 %v123, %v124
    %v126 = vrot.slane %v125, 1
    %v127 = vadd.f32 %v125, %v126
    %s128 = vtos %v127
    %v129 = vstv %s128
    %130 = vst [vmem:[#allocation7] sm:$0xff] %v129
    // Predicated region
    $region18: #{tpu_custom_call.1} parent=1 // pred_check
      _
    $region19: #{tpu_custom_call.1} parent=1 // pred_check_branch
      %132 = sbr.rel (0) target = $region21
    $region20: #{tpu_custom_call.1} parent=1 // pred_region
      %134 = vsyncadd [#allocation4], 0
      %s136 = sshll.u32 [#allocation7], 4
      %s137 = int_to_ptr.vmem [resolvable:$true] %s136
      %s138 = sshll.u32 %s2, 4
      %s139 = int_to_ptr.hbm [resolvable:$true] %s138
      %141 = dma.vmem_to_hbm [thread:$0]  %s137, 128, %s139, [#allocation4]
    $region21: #{tpu_custom_call.1} parent=1 // pred_fallthru
      _
    // Predicated region
    $region22: #{tpu_custom_call.1} parent=1 // pred_check
      _
    $region23: #{tpu_custom_call.1} parent=1 // pred_check_branch
      %143 = sbr.rel (0) target = $region25
    $region24: #{tpu_custom_call.1} parent=1 // pred_region
      %145 = dma.done [#allocation4], 128
    $region25: #{tpu_custom_call.1} parent=1 // pred_fallthru
      _
    %146 = vsyncpa [#allocation3], 1
    %147 = vsyncpa [#allocation6], 1
    %148 = vsyncpa [#allocation4], 1

</llo_original>
